<compile_context>
chip_gen: v7x
topology: tpu7x:2x2x1
jax: 0.10.0
libtpu: 0.0.40
codegen_flags: <defaults>
</compile_context>

<pallas_src>
import jax
import jax.numpy as jnp
import numpy as np
from jax.experimental import pallas as pl
from jax.experimental.pallas import tpu as pltpu

FILTER_ORDER = 6
N_COEFFS = FILTER_ORDER + 1        # 7 polynomial coefficients
N_SCALARS = N_COEFFS + 1           # + 2/max_eig

LANES = 128
TILE_ROWS_MAX = 2048               # 2048*128*4B = 1 MiB per buffer
SMALL_ROWS = 64                    # N <= 8192 -> plain-jnp fast path

# ----- base filter patterns (same values as the PyTorch module) -----
_FILTER_PATTERNS = {
    "smooth":      [1.0, -0.5, 0.1, -0.02, 0.004, -0.0008, 0.00015],
    "golden_036":  [1.0, -0.36, 0.1296, -0.22, 0.1564, -0.088, 0.0548],
    "butterworth": [1.0, -0.6, 0.2, -0.05, 0.01, -0.002, 0.0003],
    "gaussian":    [1.0, -0.7, 0.15, -0.03, 0.005, -0.0007, 8e-05],
}
_FILTER_NAMES = ["golden_036", "smooth", "butterworth", "gaussian"]

# Chebyshev->monomial change of basis on [-1, 1]:
#   row k, col j = coefficient of x^j in T_k(x).
_CHEB_TO_MONO = np.array([
    [ 1.,   0.,   0.,   0.,   0.,   0.,   0.],
    [ 0.,   1.,   0.,   0.,   0.,   0.,   0.],
    [-1.,   0.,   2.,   0.,   0.,   0.,   0.],
    [ 0.,  -3.,   0.,   4.,   0.,   0.,   0.],
    [ 1.,   0.,  -8.,   0.,   8.,   0.,   0.],
    [ 0.,   5.,   0., -20.,   0.,  16.,   0.],
    [-1.,   0.,  18.,   0., -48.,   0.,  32.],
], dtype=np.float32)


def _get_filter_coefficients(name, order):
    coeffs = list(_FILTER_PATTERNS[name])
    if len(coeffs) > order + 1:
        coeffs = coeffs[: order + 1]
    elif len(coeffs) < order + 1:
        coeffs = coeffs + [0.0] * (order + 1 - len(coeffs))
    return np.asarray(coeffs, dtype=np.float32)


def init_params(init_filter_name="smooth", filter_order=FILTER_ORDER):
    """Deterministic parameter init mirroring EnhancedSpectralBasisFilter.__init__."""
    filter_bank = np.stack(
        [_get_filter_coefficients(n, filter_order) for n in _FILTER_NAMES], axis=0
    )  # (4, order+1)
    init_weights = np.full((len(_FILTER_NAMES),), 0.25, dtype=np.float32)
    for i, name in enumerate(_FILTER_NAMES):
        if name == init_filter_name:
            init_weights[i] = 0.4
        elif name == "golden_036":
            init_weights[i] = 0.3
    init_weights = init_weights / init_weights.sum()
    return {
        "filter_bank": jnp.asarray(filter_bank),                       # buffers
        "mixing_weights": jnp.asarray(init_weights),                   # (4,)
        "refinement_coeffs": jnp.zeros((filter_order + 1,), jnp.float32),
        "refinement_scale": jnp.float32(0.2),
        "transform_scale": jnp.float32(1.0),
        "transform_bias": jnp.float32(0.0),
    }


def _round_up(x, m):
    return ((x + m - 1) // m) * m


# ----- shared elementwise math (used by the kernel and the small-N path) -----
def _horner(x, coeffs):
    # coeffs[0..6] -> (((((c6*x + c5)*x + c4)*x + c3)*x + c2)*x + c1)*x + c0
    acc = coeffs[-1] * x + coeffs[-2]
    for c in coeffs[-3::-1]:
        acc = acc * x + c
    return acc


def _apply_filter(x_norm, coeffs):
    p = _horner(x_norm, coeffs)
    return jnp.exp(-jnp.minimum(jnp.abs(p), 10.0)) + 1e-6


# ----- Pallas kernel: Horner polynomial + nonlinearity on one (tile_r, 128) tile -----
def _spectral_filter_kernel(params_ref, ev_ref, out_ref):
    # params_ref: SMEM (N_SCALARS,) = [d0..d6 (monomial, scale/bias folded), 2/max_eig]
    # ev_ref / out_ref: VMEM (tile_r, 128)
    coeffs = [params_ref[i] for i in range(N_COEFFS)]   # scalar SMEM reads, once
    two_over_max = params_ref[N_COEFFS]
    x = ev_ref[...] * two_over_max - 1.0                 # normalize, no per-elem divide
    out_ref[...] = _apply_filter(x, coeffs).astype(out_ref.dtype)


def _final_poly_coeffs(params):
    """Softmax mixing + tanh refinement, then fold scale/bias into monomial coeffs."""
    weights = jax.nn.softmax(params["mixing_weights"])                      # (4,)
    # Broadcast-multiply + sum (VPU, f32) instead of einsum to avoid bf16 MXU paths.
    mixed_coeffs = (weights[:, None] * params["filter_bank"]).sum(axis=0)   # (7,)
    refinement = params["refinement_scale"] * jnp.tanh(params["refinement_coeffs"])
    final_cheb = mixed_coeffs + refinement                                  # (7,)
    cheb_to_mono = jnp.asarray(_CHEB_TO_MONO)
    poly_x = (final_cheb[:, None] * cheb_to_mono).sum(axis=0)               # monomial in x
    poly_x = poly_x * params["transform_scale"]
    poly_x = poly_x.at[0].add(params["transform_bias"])
    return poly_x.astype(jnp.float32)


def enhanced_spectral_basis_filter(eigenvalues, params, *, max_eig=None,
                                   out_dtype=jnp.float32):
    """Forward pass. eigenvalues: f32[N] -> out_dtype[N].

    max_eig: optional precomputed spectral radius. Supplying it skips the extra
    full-HBM max reduction (8 B/elem instead of 12 B/elem of traffic).
    """
    eigenvalues = eigenvalues.astype(jnp.float32)
    n = eigenvalues.shape[0]

    # --- tiny glue: coefficient mixing + Chebyshev->monomial fold (length-7) ---
    poly_x = _final_poly_coeffs(params)

    if max_eig is None:
        max_eig = jnp.max(eigenvalues)
    max_eig = jnp.asarray(max_eig, jnp.float32) + 1e-8
    two_over_max = jnp.float32(2.0) / max_eig            # scalar reciprocal, exact divide

    rows_needed = pl.cdiv(n, LANES)

    # --- small-N fast path: one fused XLA elementwise op, no pallas dispatch ---
    if rows_needed <= SMALL_ROWS:
        x = eigenvalues * two_over_max - 1.0
        coeffs = [poly_x[i] for i in range(N_COEFFS)]
        return _apply_filter(x, coeffs).astype(out_dtype)

    # --- lane-dense (rows, 128) view; pad only when N is not lane-aligned ---
    rem = n % LANES
    ev_flat = jnp.pad(eigenvalues, (0, LANES - rem)) if rem else eigenvalues
    rows = ev_flat.shape[0] // LANES
    ev2d = ev_flat.reshape(rows, LANES)

    # Tile selection: <= 1 MiB/buffer, even tile count and (near-)equal tiles so
    # the "parallel" grid axis splits 50/50 across the two v7x TensorCores.
    num_tiles = max(2, pl.cdiv(rows, TILE_ROWS_MAX))
    if num_tiles % 2:
        num_tiles += 1
    tile_r = min(_round_up(pl.cdiv(rows, num_tiles), 8), TILE_ROWS_MAX)
    grid = (pl.cdiv(rows, tile_r),)

    scalar_params = jnp.concatenate(
        [poly_x, jnp.reshape(two_over_max, (1,))]
    ).astype(jnp.float32)                                                    # (8,)

    out2d = pl.pallas_call(
        _spectral_filter_kernel,
        out_shape=jax.ShapeDtypeStruct((rows, LANES), out_dtype),
        grid=grid,
        in_specs=[
            pl.BlockSpec(memory_space=pltpu.MemorySpace.SMEM),     # scalar params
            pl.BlockSpec((tile_r, LANES), lambda i: (i, 0)),       # eigenvalue tile
        ],
        out_specs=pl.BlockSpec((tile_r, LANES), lambda i: (i, 0)),
        compiler_params=pltpu.CompilerParams(
            dimension_semantics=("parallel",)),                    # megacore on v7x
    )(scalar_params, ev2d)

    out = out2d.reshape(-1)
    return out if rem == 0 else out[:n]
    # TODO(synk): if many eigenvalue vectors are filtered per step, batch them as
    # extra rows of the same slab to amortize the single pallas_call dispatch.


# ----- pure-JAX reference (mirrors the PyTorch forward exactly) -----
def reference_forward(eigenvalues, params):
    eigenvalues = eigenvalues.astype(jnp.float32)
    weights = jax.nn.softmax(params["mixing_weights"])
    mixed = (weights[:, None] * params["filter_bank"]).sum(axis=0)
    refinement = params["refinement_scale"] * jnp.tanh(params["refinement_coeffs"])
    coeffs = mixed + refinement
    max_eig = jnp.max(eigenvalues) + 1e-8
    x = 2.0 * (eigenvalues / max_eig) - 1.0
    result = coeffs[0] * jnp.ones_like(x)
    t_prev, t_curr = jnp.ones_like(x), x
    result = result + coeffs[1] * t_curr
    for i in range(2, N_COEFFS):
        t_next = 2.0 * x * t_curr - t_prev
        result = result + coeffs[i] * t_next
        t_prev, t_curr = t_curr, t_next
    result = params["transform_scale"] * result + params["transform_bias"]
    return jnp.exp(-jnp.minimum(jnp.abs(result), 10.0)) + 1e-6


if __name__ == "__main__":
    key = jax.random.PRNGKey(0)
    params = init_params(init_filter_name="smooth", filter_order=FILTER_ORDER)

    # Cases:
    #   N=1000     -> small-N fused-jnp fast path
    #   N=100000   -> non-lane-aligned pad path, 2 balanced tiles + partial edge block
    #   N=524288   -> lane-aligned, max-size (2048x128) tiles, precomputed max_eig API
    for N, pass_max in ((1000, False), (100_000, False), (128 * 4096, True)):
        k = jax.random.fold_in(key, N)
        eigenvalues = jax.random.uniform(k, (N,), dtype=jnp.float32,
                                         minval=0.0, maxval=2.0)
        kwargs = {"max_eig": jnp.max(eigenvalues)} if pass_max else {}
        out = jax.block_until_ready(
            enhanced_spectral_basis_filter(eigenvalues, params, **kwargs))
        ref = jax.block_until_ready(reference_forward(eigenvalues, params))
        np.testing.assert_allclose(np.asarray(out), np.asarray(ref),
                                   rtol=1e-5, atol=1e-6)
        assert out.shape == (N,) and out.dtype == jnp.float32

    print("KERNEL_OK")
</pallas_src>

<mosaic_0001>
module attributes {stable_mosaic.version = 11 : i64} {
  func.func @_spectral_filter_kernel(%arg0: i32, %arg1: memref<8xf32, #tpu.memory_space<smem>>, %arg2: memref<392x128xf32, #tpu.memory_space<vmem>>, %arg3: memref<392x128xf32, #tpu.memory_space<vmem>>) attributes {dimension_semantics = [#tpu.dimension_semantics<parallel>], iteration_bounds = array<i64: 2>, scalar_prefetch = 0 : i64, scratch_operands = 0 : i64, tpu.core_type = #tpu.core_type<tc>, window_params = [{transform_indices = @transform_0, window_bounds = array<i64: 8>}, {transform_indices = @transform_1, window_bounds = array<i64: 392, 128>}, {transform_indices = @transform_2, window_bounds = array<i64: 392, 128>}]} {
    %c0 = arith.constant 0 : index
    %0 = memref.load %arg1[%c0] : memref<8xf32, #tpu.memory_space<smem>>
    %c1 = arith.constant 1 : index
    %1 = memref.load %arg1[%c1] : memref<8xf32, #tpu.memory_space<smem>>
    %c2 = arith.constant 2 : index
    %2 = memref.load %arg1[%c2] : memref<8xf32, #tpu.memory_space<smem>>
    %c3 = arith.constant 3 : index
    %3 = memref.load %arg1[%c3] : memref<8xf32, #tpu.memory_space<smem>>
    %c4 = arith.constant 4 : index
    %4 = memref.load %arg1[%c4] : memref<8xf32, #tpu.memory_space<smem>>
    %c5 = arith.constant 5 : index
    %5 = memref.load %arg1[%c5] : memref<8xf32, #tpu.memory_space<smem>>
    %c6 = arith.constant 6 : index
    %6 = memref.load %arg1[%c6] : memref<8xf32, #tpu.memory_space<smem>>
    %c7 = arith.constant 7 : index
    %7 = memref.load %arg1[%c7] : memref<8xf32, #tpu.memory_space<smem>>
    %c0_0 = arith.constant 0 : index
    %c0_1 = arith.constant 0 : index
    %8 = vector.load %arg2[%c0_0, %c0_1] : memref<392x128xf32, #tpu.memory_space<vmem>>, vector<392x128xf32>
    %9 = vector.broadcast %7 : f32 to vector<392x128xf32>
    %10 = arith.mulf %8, %9 : vector<392x128xf32>
    %cst = arith.constant 1.000000e+00 : f32
    %11 = vector.broadcast %cst : f32 to vector<392x128xf32>
    %12 = arith.subf %10, %11 : vector<392x128xf32>
    %13 = vector.broadcast %6 : f32 to vector<392x128xf32>
    %14 = arith.mulf %13, %12 : vector<392x128xf32>
    %15 = vector.broadcast %5 : f32 to vector<392x128xf32>
    %16 = arith.addf %14, %15 : vector<392x128xf32>
    %17 = arith.mulf %16, %12 : vector<392x128xf32>
    %18 = vector.broadcast %4 : f32 to vector<392x128xf32>
    %19 = arith.addf %17, %18 : vector<392x128xf32>
    %20 = arith.mulf %19, %12 : vector<392x128xf32>
    %21 = vector.broadcast %3 : f32 to vector<392x128xf32>
    %22 = arith.addf %20, %21 : vector<392x128xf32>
    %23 = arith.mulf %22, %12 : vector<392x128xf32>
    %24 = vector.broadcast %2 : f32 to vector<392x128xf32>
    %25 = arith.addf %23, %24 : vector<392x128xf32>
    %26 = arith.mulf %25, %12 : vector<392x128xf32>
    %27 = vector.broadcast %1 : f32 to vector<392x128xf32>
    %28 = arith.addf %26, %27 : vector<392x128xf32>
    %29 = arith.mulf %28, %12 : vector<392x128xf32>
    %30 = vector.broadcast %0 : f32 to vector<392x128xf32>
    %31 = arith.addf %29, %30 : vector<392x128xf32>
    %32 = math.absf %31 : vector<392x128xf32>
    %cst_2 = arith.constant 1.000000e+01 : f32
    %33 = vector.broadcast %cst_2 : f32 to vector<392x128xf32>
    %34 = arith.minimumf %32, %33 : vector<392x128xf32>
    %cst_3 = arith.constant 0.000000e+00 : f32
    %35 = vector.broadcast %cst_3 : f32 to vector<392x128xf32>
    %36 = arith.subf %35, %34 : vector<392x128xf32>
    %37 = math.exp %36 : vector<392x128xf32>
    %cst_4 = arith.constant 9.99999997E-7 : f32
    %38 = vector.broadcast %cst_4 : f32 to vector<392x128xf32>
    %39 = arith.addf %37, %38 : vector<392x128xf32>
    %c0_5 = arith.constant 0 : index
    %c0_6 = arith.constant 0 : index
    %40 = vector.load %arg3[%c0_5, %c0_6] : memref<392x128xf32, #tpu.memory_space<vmem>>, vector<392x128xf32>
    tpu.vector_store %arg3[%c0_5, %c0_6], %39 {strides = array<i32>} : memref<392x128xf32, #tpu.memory_space<vmem>>, vector<392x128xf32>,
    return
  }
  func.func @transform_0(%arg0: i32) -> i32 {
    %c0_i32 = arith.constant 0 : i32
    %c0_i32_0 = arith.constant 0 : i32
    return %c0_i32 : i32
  }
  func.func @transform_1(%arg0: i32) -> (i32, i32) {
    %c0_i32 = arith.constant 0 : i32
    %c0_i32_0 = arith.constant 0 : i32
    return %arg0, %c0_i32 : i32, i32
  }
  func.func @transform_2(%arg0: i32) -> (i32, i32) {
    %c0_i32 = arith.constant 0 : i32
    %c0_i32_0 = arith.constant 0 : i32
    return %arg0, %c0_i32 : i32, i32
  }
}

</mosaic_0001>

<llo_original>
// kernel: tpu_custom_call.1
$region0: #{tpu_custom_call.1}
  #allocation0 [shape = 'u32[]', space=smem, size = 0x4, offset = 0x4, fixed_abs, tag = 'smem constant byte address 0x4 - core index']
  #allocation1 [shape = 'u32[144,128]{1,0:T(1,128)}', space=vmem, size = 0x12000, scoped, tag = 'internal scratch']
  %s0 = inlined_call_operand.hbm [shape: f32[8], index: 0, kind: input, shape index: {}]
  %s1 = inlined_call_operand.hbm [shape: f32[782,128], index: 1, kind: input, shape index: {}]
  %s2 = inlined_call_operand.hbm [shape: f32[782,128], index: 2, kind: output, shape index: {}]
  %s3 = sld [smem:[#allocation0]]
  $region49: #{tpu_custom_call.1} parent=0
    _
  %s5 = ssub.s32 1, %s3
  %s6 = scalar_select 0, %s5, %s3
  $region1: #{tpu_custom_call.1} parent=0
    #allocation2 [shape = 'u8[512]{0}', space=smem, size = 0x200, scoped, tag = 'input window, operand 0, single buffered']
    #allocation3 [shape = 's32[2]{0}', space=sflag, size = 0x8, scoped, tag = 'scoped memory for tpu_custom_call.1']
    #allocation4 [shape = 's32[2]{0}', space=sflag, size = 0x8, scoped, tag = 'scoped memory for tpu_custom_call.1']
    #allocation5 [shape = 's32[2]{0}', space=sflag, size = 0x8, scoped, tag = 'scoped memory for tpu_custom_call.1']
    #allocation6 [shape = 'u8[401408]{0}', space=vmem, size = 0x62000, scoped, tag = 'input window, operand 1']
    #allocation7 [shape = 'u8[401408]{0}', space=vmem, size = 0x62000, scoped, tag = 'output window, operand 0']
    %7 = vsyncpa [#allocation5], 0
    %8 = vsyncpa [#allocation3], 0
    %s9 = scalar_lea.sflag [#allocation3], 1
    %10 = vsyncpa %s9, 0
    %11 = vsyncpa [#allocation4], 0
    %s12 = scalar_lea.sflag [#allocation4], 1
    %13 = vsyncpa %s12, 0
    loop: start=0, step=1, limit=4
    $region2: #{tpu_custom_call.1} parent=1 // loop_pre_header
      _
    $region3: #{tpu_custom_call.1} parent=1 // loop_header
      %s15 = sphi 0, %s19
      %p16 = scmp.ge.s32.totalorder %s15, 4
      %s23 = sphi 0, %s23
      %s25 = sphi 0, %s23
      %s26 = sphi 0, %s25
      %s40 = sphi 0, %s26
      %s46 = sphi 0, %s48
      %s49 = sphi 0, %s46
      %s50 = sphi 0, %s49
      %s66 = sphi 0, %s50
      %s72 = sphi 0, %s74
      %s75 = sphi 0, %s72
      %s76 = sphi 0, %s75
      %s92 = sphi 0, %s76
    $region4: #{tpu_custom_call.1} parent=1 // loop_header_branch
      %18 = sbr.rel (%p16) target = $region8
    $region5: #{tpu_custom_call.1} parent=1 // loop_body
      %s20 = ssub.s32 %s15, 1
      %s21 = ssub.s32 %s15, 2
      %s22 = sadd.s32 %s15, 1
      %s24 = sadd.s32 %s23, 1
      %p27 = scmp.eq.s32.totalorder %s15, 1
      %p28 = scmp.ne.s32.totalorder %s23, %s25
      %p29 = scmp.eq.s32.totalorder %s15, 0
      %p30 = por %p28, %p29
      %p31 = scmp.ne.s32.totalorder %s23, %s25
      %p32 = scmp.eq.s32.totalorder %s20, 1
      %p33 = por %p31, %p32
      %p34 = scmp.ne.s32.totalorder %s25, %s26
      %p35 = scmp.eq.s32.totalorder %s20, 0
      %p36 = por %p34, %p35
      %p37 = scmp.ne.s32.totalorder %s25, %s26
      %p38 = scmp.eq.s32.totalorder %s21, 1
      %p39 = por %p37, %p38
      %p41 = scmp.ne.s32.totalorder %s26, %s40
      %p42 = scmp.eq.s32.totalorder %s21, 0
      %p43 = por %p41, %p42
      %s44 = ssub.s32 %s15, %s22
      %p45 = scmp.eq.s32.totalorder %s44, 0
      %s47 = sadd.s32 %s46, 1
      %s48 = scalar_select %p45, %s46, %s47
      %p51 = pneg %p45
      %p52 = scmp.eq.s32.totalorder %s15, 1
      %p53 = por %p51, %p52
      %p54 = scmp.ne.s32.totalorder %s46, %s49
      %p55 = scmp.eq.s32.totalorder %s15, 0
      %p56 = por %p54, %p55
      %p57 = scmp.ne.s32.totalorder %s46, %s49
      %p58 = scmp.eq.s32.totalorder %s20, 1
      %p59 = por %p57, %p58
      %p60 = scmp.ne.s32.totalorder %s49, %s50
      %p61 = scmp.eq.s32.totalorder %s20, 0
      %p62 = por %p60, %p61
      %p63 = scmp.ne.s32.totalorder %s49, %s50
      %p64 = scmp.eq.s32.totalorder %s21, 1
      %p65 = por %p63, %p64
      %p67 = scmp.ne.s32.totalorder %s50, %s66
      %p68 = scmp.eq.s32.totalorder %s21, 0
      %p69 = por %p67, %p68
      %s70 = ssub.s32 %s15, %s22
      %p71 = scmp.eq.s32.totalorder %s70, 0
      %s73 = sadd.s32 %s72, 1
      %s74 = scalar_select %p71, %s72, %s73
      %p77 = pneg %p71
      %p78 = scmp.eq.s32.totalorder %s15, 1
      %p79 = por %p77, %p78
      %p80 = scmp.ne.s32.totalorder %s72, %s75
      %p81 = scmp.eq.s32.totalorder %s15, 0
      %p82 = por %p80, %p81
      %p83 = scmp.ne.s32.totalorder %s72, %s75
      %p84 = scmp.eq.s32.totalorder %s20, 1
      %p85 = por %p83, %p84
      %p86 = scmp.ne.s32.totalorder %s75, %s76
      %p87 = scmp.eq.s32.totalorder %s20, 0
      %p88 = por %p86, %p87
      %p89 = scmp.ne.s32.totalorder %s75, %s76
      %p90 = scmp.eq.s32.totalorder %s21, 1
      %p91 = por %p89, %p90
      %p93 = scmp.ne.s32.totalorder %s76, %s92
      %p94 = scmp.eq.s32.totalorder %s21, 0
      %p95 = por %p93, %p94
      %p96 = scmp.le.s32.totalorder 1, %s15
      %p97 = scmp.lt.s32.totalorder %s15, 3
      %p98 = pnand %p96, %p97
      %p99 = pneg %p98
      // Predicated region
      $region9: #{tpu_custom_call.1} parent=5 // pred_check
        _
      $region10: #{tpu_custom_call.1} parent=5 // pred_check_branch
        %101 = sbr.rel (%p98) target = $region12
      $region11: #{tpu_custom_call.1} parent=5 // pred_region
        %s102 = ssub.s32 %s15, 1
        // Predicated region
        $region13: #{tpu_custom_call.1} parent=11 // pred_check
          %p103 = pneg %p36
        $region14: #{tpu_custom_call.1} parent=11 // pred_check_branch
          %105 = sbr.rel (%p103) target = $region16
        $region15: #{tpu_custom_call.1} parent=11 // pred_region
          %s107 = ssub.s32 16, 16
          %108 = vsyncadd [#allocation5], %s107
          %111 = dma.hbm_to_smem %s0, 16, [#allocation2], [#allocation5]
        $region16: #{tpu_custom_call.1} parent=11 // pred_fallthru
          _
      $region12: #{tpu_custom_call.1} parent=5 // pred_fallthru
        _
      %p112 = scmp.lt.s32.totalorder %s15, 2
      // Predicated region
      $region17: #{tpu_custom_call.1} parent=5 // pred_check
        %p113 = pneg %p112
      $region18: #{tpu_custom_call.1} parent=5 // pred_check_branch
        %115 = sbr.rel (%p113) target = $region20
      $region19: #{tpu_custom_call.1} parent=5 // pred_region
        // Predicated region
        $region21: #{tpu_custom_call.1} parent=19 // pred_check
          %p116 = pneg %p56
        $region22: #{tpu_custom_call.1} parent=19 // pred_check_branch
          %118 = sbr.rel (%p116) target = $region24
        $region23: #{tpu_custom_call.1} parent=19 // pred_region
          %s119 = sand.u32 %s46, 1
          %s120 = scalar_lea.sflag [#allocation3], %s119
          %s121 = sand.u32 %s46, 1
          %s122 = smul.addr %s121, 392
          %s123 = scalar_lea.vmem [#allocation6], %s122
          %s124 = smul.u32 49, %s15
          %s126 = ssub.s32 6272, 6272
          %127 = vsyncadd %s120, %s126
          %s128 = smul.addr %s124, 128
          %s129 = scalar_lea.hbm %s1, %s128
          %s130 = sshll.u32 %s123, 4
          %s131 = int_to_ptr.vmem [resolvable:$true] %s130
          %136 = dma.hbm_to_vmem [thread:$0]  %s129, 6272, %s131, %s120, 128, 128, 8
        $region24: #{tpu_custom_call.1} parent=19 // pred_fallthru
          _
      $region20: #{tpu_custom_call.1} parent=5 // pred_fallthru
        _
      %p137 = scmp.le.s32.totalorder 1, %s15
      %p138 = scmp.lt.s32.totalorder %s15, 3
      %p139 = pnand %p137, %p138
      %p140 = pneg %p139
      // Predicated region
      $region25: #{tpu_custom_call.1} parent=5 // pred_check
        _
      $region26: #{tpu_custom_call.1} parent=5 // pred_check_branch
        %142 = sbr.rel (%p139) target = $region28
      $region27: #{tpu_custom_call.1} parent=5 // pred_region
        %s143 = ssub.s32 %s15, 1
        // Predicated region
        $region29: #{tpu_custom_call.1} parent=27 // pred_check
          %p144 = pneg %p36
        $region30: #{tpu_custom_call.1} parent=27 // pred_check_branch
          %146 = sbr.rel (%p144) target = $region32
        $region31: #{tpu_custom_call.1} parent=27 // pred_region
          %147 = dma.done [#allocation5], 16
        $region32: #{tpu_custom_call.1} parent=27 // pred_fallthru
          _
        %s148 = sand.u32 %s49, 1
        %s149 = scalar_lea.sflag [#allocation3], %s148
        %s150 = sand.u32 %s49, 1
        %s151 = smul.addr %s150, 392
        %s152 = scalar_lea.vmem [#allocation6], %s151
        // Predicated region
        $region33: #{tpu_custom_call.1} parent=27 // pred_check
          %p153 = pneg %p62
        $region34: #{tpu_custom_call.1} parent=27 // pred_check_branch
          %155 = sbr.rel (%p153) target = $region36
        $region35: #{tpu_custom_call.1} parent=27 // pred_region
          %156 = dma.done %s149, 6272
        $region36: #{tpu_custom_call.1} parent=27 // pred_fallthru
          _
        %157 = sfence
        %p158 = pneg %p36
        %p159 = pneg %p33
        %s160 = sand.u32 %s49, 1
        %s161 = scalar_lea.sflag [#allocation3], %s160
        %s162 = sand.u32 %s49, 1
        %s163 = smul.addr %s162, 392
        %s164 = scalar_lea.vmem [#allocation6], %s163
        %p165 = pneg %p62
        %p166 = pneg %p59
        %p167 = pneg %p88
        %p168 = pneg %p85
        %s169 = sand.u32 %s75, 1
        %s170 = scalar_lea.sflag [#allocation4], %s169
        %s171 = sand.u32 %s75, 1
        %s172 = smul.addr %s171, 392
        %s173 = scalar_lea.vmem [#allocation7], %s172
        %s174 = smul.u32 49, %s20
        %s175 = smul.u32 49, %s20
        %s176 = sld [smem:[#allocation2]]
        %s177 = sld [smem:[#allocation2 + $0x1]]
        %s178 = sld [smem:[#allocation2 + $0x2]]
        %s179 = sld [smem:[#allocation2 + $0x3]]
        %s180 = sld [smem:[#allocation2 + $0x4]]
        %s181 = sld [smem:[#allocation2 + $0x5]]
        %s182 = sld [smem:[#allocation2 + $0x6]]
        %s183 = sld [smem:[#allocation2 + $0x7]]
        %v184 = vld [vmem:[%s152] sm:$0xff]
        %v185 = vld [vmem:[%s152 + $0x8] sm:$0xff]
        %v186 = vld [vmem:[%s152 + $0x10] sm:$0xff]
        %v187 = vld [vmem:[%s152 + $0x18] sm:$0xff]
        %v188 = vld [vmem:[%s152 + $0x20] sm:$0xff]
        %v189 = vld [vmem:[%s152 + $0x28] sm:$0xff]
        %v190 = vld [vmem:[%s152 + $0x30] sm:$0xff]
        %v191 = vld [vmem:[%s152 + $0x38] sm:$0xff]
        %v192 = vld [vmem:[%s152 + $0x40] sm:$0xff]
        %v193 = vld [vmem:[%s152 + $0x48] sm:$0xff]
        %v194 = vld [vmem:[%s152 + $0x50] sm:$0xff]
        %v195 = vld [vmem:[%s152 + $0x58] sm:$0xff]
        %v196 = vld [vmem:[%s152 + $0x60] sm:$0xff]
        %v197 = vld [vmem:[%s152 + $0x68] sm:$0xff]
        %v198 = vld [vmem:[%s152 + $0x70] sm:$0xff]
        %v199 = vld [vmem:[%s152 + $0x78] sm:$0xff]
        %v200 = vld [vmem:[%s152 + $0x80] sm:$0xff]
        %v201 = vld [vmem:[%s152 + $0x88] sm:$0xff]
        %v202 = vld [vmem:[%s152 + $0x90] sm:$0xff]
        %v203 = vld [vmem:[%s152 + $0x98] sm:$0xff]
        %v204 = vld [vmem:[%s152 + $0xa0] sm:$0xff]
        %v205 = vld [vmem:[%s152 + $0xa8] sm:$0xff]
        %v206 = vld [vmem:[%s152 + $0xb0] sm:$0xff]
        %v207 = vld [vmem:[%s152 + $0xb8] sm:$0xff]
        %v208 = vld [vmem:[%s152 + $0xc0] sm:$0xff]
        %v209 = vld [vmem:[%s152 + $0xc8] sm:$0xff]
        %v210 = vld [vmem:[%s152 + $0xd0] sm:$0xff]
        %v211 = vld [vmem:[%s152 + $0xd8] sm:$0xff]
        %v212 = vld [vmem:[%s152 + $0xe0] sm:$0xff]
        %v213 = vld [vmem:[%s152 + $0xe8] sm:$0xff]
        %v214 = vld [vmem:[%s152 + $0xf0] sm:$0xff]
        %v215 = vld [vmem:[%s152 + $0xf8] sm:$0xff]
        %v216 = vld [vmem:[%s152 + $0x100] sm:$0xff]
        %v217 = vld [vmem:[%s152 + $0x108] sm:$0xff]
        %v218 = vld [vmem:[%s152 + $0x110] sm:$0xff]
        %v219 = vld [vmem:[%s152 + $0x118] sm:$0xff]
        %v220 = vld [vmem:[%s152 + $0x120] sm:$0xff]
        %v221 = vld [vmem:[%s152 + $0x128] sm:$0xff]
        %v222 = vld [vmem:[%s152 + $0x130] sm:$0xff]
        %v223 = vld [vmem:[%s152 + $0x138] sm:$0xff]
        %v224 = vld [vmem:[%s152 + $0x140] sm:$0xff]
        %v225 = vld [vmem:[%s152 + $0x148] sm:$0xff]
        %v226 = vld [vmem:[%s152 + $0x150] sm:$0xff]
        %v227 = vld [vmem:[%s152 + $0x158] sm:$0xff]
        %v228 = vld [vmem:[%s152 + $0x160] sm:$0xff]
        %v229 = vld [vmem:[%s152 + $0x168] sm:$0xff]
        %v230 = vld [vmem:[%s152 + $0x170] sm:$0xff]
        %v231 = vld [vmem:[%s152 + $0x178] sm:$0xff]
        %v232 = vld [vmem:[%s152 + $0x180] sm:$0xff]
        %v233 = vstv %s183
        %v234 = vmul.f32 %v184, %v233
        %v235 = vmul.f32 %v185, %v233
        %v236 = vmul.f32 %v186, %v233
        %v237 = vmul.f32 %v187, %v233
        %v238 = vmul.f32 %v188, %v233
        %v239 = vmul.f32 %v189, %v233
        %v240 = vmul.f32 %v190, %v233
        %v241 = vmul.f32 %v191, %v233
        %v242 = vmul.f32 %v192, %v233
        %v243 = vmul.f32 %v193, %v233
        %v244 = vmul.f32 %v194, %v233
        %v245 = vmul.f32 %v195, %v233
        %v246 = vmul.f32 %v196, %v233
        %v247 = vmul.f32 %v197, %v233
        %v248 = vmul.f32 %v198, %v233
        %v249 = vmul.f32 %v199, %v233
        %v250 = vmul.f32 %v200, %v233
        %v251 = vmul.f32 %v201, %v233
        %v252 = vmul.f32 %v202, %v233
        %v253 = vmul.f32 %v203, %v233
        %v254 = vmul.f32 %v204, %v233
        %v255 = vmul.f32 %v205, %v233
        %v256 = vmul.f32 %v206, %v233
        %v257 = vmul.f32 %v207, %v233
        %v258 = vmul.f32 %v208, %v233
        %v259 = vmul.f32 %v209, %v233
        %v260 = vmul.f32 %v210, %v233
        %v261 = vmul.f32 %v211, %v233
        %v262 = vmul.f32 %v212, %v233
        %v263 = vmul.f32 %v213, %v233
        %v264 = vmul.f32 %v214, %v233
        %v265 = vmul.f32 %v215, %v233
        %v266 = vmul.f32 %v216, %v233
        %v267 = vmul.f32 %v217, %v233
        %v268 = vmul.f32 %v218, %v233
        %v269 = vmul.f32 %v219, %v233
        %v270 = vmul.f32 %v220, %v233
        %v271 = vmul.f32 %v221, %v233
        %v272 = vmul.f32 %v222, %v233
        %v273 = vmul.f32 %v223, %v233
        %v274 = vmul.f32 %v224, %v233
        %v275 = vmul.f32 %v225, %v233
        %v276 = vmul.f32 %v226, %v233
        %v277 = vmul.f32 %v227, %v233
        %v278 = vmul.f32 %v228, %v233
        %v279 = vmul.f32 %v229, %v233
        %v280 = vmul.f32 %v230, %v233
        %v281 = vmul.f32 %v231, %v233
        %v282 = vmul.f32 %v232, %v233
        %v283 = vsub.f32 %v234, 1.0
        %v284 = vsub.f32 %v235, 1.0
        %v285 = vsub.f32 %v236, 1.0
        %v286 = vsub.f32 %v237, 1.0
        %v287 = vsub.f32 %v238, 1.0
        %v288 = vsub.f32 %v239, 1.0
        %v289 = vsub.f32 %v240, 1.0
        %v290 = vsub.f32 %v241, 1.0
        %v291 = vsub.f32 %v242, 1.0
        %v292 = vsub.f32 %v243, 1.0
        %v293 = vsub.f32 %v244, 1.0
        %v294 = vsub.f32 %v245, 1.0
        %v295 = vsub.f32 %v246, 1.0
        %v296 = vsub.f32 %v247, 1.0
        %v297 = vsub.f32 %v248, 1.0
        %v298 = vsub.f32 %v249, 1.0
        %v299 = vsub.f32 %v250, 1.0
        %v300 = vsub.f32 %v251, 1.0
        %v301 = vsub.f32 %v252, 1.0
        %v302 = vsub.f32 %v253, 1.0
        %v303 = vsub.f32 %v254, 1.0
        %v304 = vsub.f32 %v255, 1.0
        %v305 = vsub.f32 %v256, 1.0
        %v306 = vsub.f32 %v257, 1.0
        %v307 = vsub.f32 %v258, 1.0
        %v308 = vsub.f32 %v259, 1.0
        %v309 = vsub.f32 %v260, 1.0
        %v310 = vsub.f32 %v261, 1.0
        %v311 = vsub.f32 %v262, 1.0
        %v312 = vsub.f32 %v263, 1.0
        %v313 = vsub.f32 %v264, 1.0
        %v314 = vsub.f32 %v265, 1.0
        %v315 = vsub.f32 %v266, 1.0
        %v316 = vsub.f32 %v267, 1.0
        %v317 = vsub.f32 %v268, 1.0
        %v318 = vsub.f32 %v269, 1.0
        %v319 = vsub.f32 %v270, 1.0
        %v320 = vsub.f32 %v271, 1.0
        %v321 = vsub.f32 %v272, 1.0
        %v322 = vsub.f32 %v273, 1.0
        %v323 = vsub.f32 %v274, 1.0
        %v324 = vsub.f32 %v275, 1.0
        %v325 = vsub.f32 %v276, 1.0
        %v326 = vsub.f32 %v277, 1.0
        %v327 = vsub.f32 %v278, 1.0
        %v328 = vsub.f32 %v279, 1.0
        %v329 = vsub.f32 %v280, 1.0
        %v330 = vsub.f32 %v281, 1.0
        %v331 = vsub.f32 %v282, 1.0
        %v332 = vstv %s182
        %v333 = vmul.f32 %v332, %v283
        %v334 = vmul.f32 %v332, %v284
        %v335 = vmul.f32 %v332, %v285
        %v336 = vmul.f32 %v332, %v286
        %v337 = vmul.f32 %v332, %v287
        %v338 = vmul.f32 %v332, %v288
        %v339 = vmul.f32 %v332, %v289
        %v340 = vmul.f32 %v332, %v290
        %v341 = vmul.f32 %v332, %v291
        %v342 = vmul.f32 %v332, %v292
        %v343 = vmul.f32 %v332, %v293
        %v344 = vmul.f32 %v332, %v294
        %v345 = vmul.f32 %v332, %v295
        %v346 = vmul.f32 %v332, %v296
        %v347 = vmul.f32 %v332, %v297
        %v348 = vmul.f32 %v332, %v298
        %v349 = vmul.f32 %v332, %v299
        %v350 = vmul.f32 %v332, %v300
        %v351 = vmul.f32 %v332, %v301
        %v352 = vmul.f32 %v332, %v302
        %v353 = vmul.f32 %v332, %v303
        %v354 = vmul.f32 %v332, %v304
        %v355 = vmul.f32 %v332, %v305
        %v356 = vmul.f32 %v332, %v306
        %v357 = vmul.f32 %v332, %v307
        %v358 = vmul.f32 %v332, %v308
        %v359 = vmul.f32 %v332, %v309
        %v360 = vmul.f32 %v332, %v310
        %v361 = vmul.f32 %v332, %v311
        %v362 = vmul.f32 %v332, %v312
        %v363 = vmul.f32 %v332, %v313
        %v364 = vmul.f32 %v332, %v314
        %v365 = vmul.f32 %v332, %v315
        %v366 = vmul.f32 %v332, %v316
        %v367 = vmul.f32 %v332, %v317
        %v368 = vmul.f32 %v332, %v318
        %v369 = vmul.f32 %v332, %v319
        %v370 = vmul.f32 %v332, %v320
        %v371 = vmul.f32 %v332, %v321
        %v372 = vmul.f32 %v332, %v322
        %v373 = vmul.f32 %v332, %v323
        %v374 = vmul.f32 %v332, %v324
        %v375 = vmul.f32 %v332, %v325
        %v376 = vmul.f32 %v332, %v326
        %v377 = vmul.f32 %v332, %v327
        %v378 = vmul.f32 %v332, %v328
        %v379 = vmul.f32 %v332, %v329
        %v380 = vmul.f32 %v332, %v330
        %v381 = vmul.f32 %v332, %v331
        %v382 = vstv %s181
        %v383 = vadd.f32 %v333, %v382
        %v384 = vadd.f32 %v334, %v382
        %v385 = vadd.f32 %v335, %v382
        %v386 = vadd.f32 %v336, %v382
        %v387 = vadd.f32 %v337, %v382
        %v388 = vadd.f32 %v338, %v382
        %v389 = vadd.f32 %v339, %v382
        %v390 = vadd.f32 %v340, %v382
        %v391 = vadd.f32 %v341, %v382
        %v392 = vadd.f32 %v342, %v382
        %v393 = vadd.f32 %v343, %v382
        %v394 = vadd.f32 %v344, %v382
        %v395 = vadd.f32 %v345, %v382
        %v396 = vadd.f32 %v346, %v382
        %v397 = vadd.f32 %v347, %v382
        %v398 = vadd.f32 %v348, %v382
        %v399 = vadd.f32 %v349, %v382
        %v400 = vadd.f32 %v350, %v382
        %v401 = vadd.f32 %v351, %v382
        %v402 = vadd.f32 %v352, %v382
        %v403 = vadd.f32 %v353, %v382
        %v404 = vadd.f32 %v354, %v382
        %v405 = vadd.f32 %v355, %v382
        %v406 = vadd.f32 %v356, %v382
        %v407 = vadd.f32 %v357, %v382
        %v408 = vadd.f32 %v358, %v382
        %v409 = vadd.f32 %v359, %v382
        %v410 = vadd.f32 %v360, %v382
        %v411 = vadd.f32 %v361, %v382
        %v412 = vadd.f32 %v362, %v382
        %v413 = vadd.f32 %v363, %v382
        %v414 = vadd.f32 %v364, %v382
        %v415 = vadd.f32 %v365, %v382
        %v416 = vadd.f32 %v366, %v382
        %v417 = vadd.f32 %v367, %v382
        %v418 = vadd.f32 %v368, %v382
        %v419 = vadd.f32 %v369, %v382
        %v420 = vadd.f32 %v370, %v382
        %v421 = vadd.f32 %v371, %v382
        %v422 = vadd.f32 %v372, %v382
        %v423 = vadd.f32 %v373, %v382
        %v424 = vadd.f32 %v374, %v382
        %v425 = vadd.f32 %v375, %v382
        %v426 = vadd.f32 %v376, %v382
        %v427 = vadd.f32 %v377, %v382
        %v428 = vadd.f32 %v378, %v382
        %v429 = vadd.f32 %v379, %v382
        %v430 = vadd.f32 %v380, %v382
        %v431 = vadd.f32 %v381, %v382
        %v432 = vmul.f32 %v383, %v283
        %v433 = vmul.f32 %v384, %v284
        %v434 = vmul.f32 %v385, %v285
        %v435 = vmul.f32 %v386, %v286
        %v436 = vmul.f32 %v387, %v287
        %v437 = vmul.f32 %v388, %v288
        %v438 = vmul.f32 %v389, %v289
        %v439 = vmul.f32 %v390, %v290
        %v440 = vmul.f32 %v391, %v291
        %v441 = vmul.f32 %v392, %v292
        %v442 = vmul.f32 %v393, %v293
        %v443 = vmul.f32 %v394, %v294
        %v444 = vmul.f32 %v395, %v295
        %v445 = vmul.f32 %v396, %v296
        %v446 = vmul.f32 %v397, %v297
        %v447 = vmul.f32 %v398, %v298
        %v448 = vmul.f32 %v399, %v299
        %v449 = vmul.f32 %v400, %v300
        %v450 = vmul.f32 %v401, %v301
        %v451 = vmul.f32 %v402, %v302
        %v452 = vmul.f32 %v403, %v303
        %v453 = vmul.f32 %v404, %v304
        %v454 = vmul.f32 %v405, %v305
        %v455 = vmul.f32 %v406, %v306
        %v456 = vmul.f32 %v407, %v307
        %v457 = vmul.f32 %v408, %v308
        %v458 = vmul.f32 %v409, %v309
        %v459 = vmul.f32 %v410, %v310
        %v460 = vmul.f32 %v411, %v311
        %v461 = vmul.f32 %v412, %v312
        %v462 = vmul.f32 %v413, %v313
        %v463 = vmul.f32 %v414, %v314
        %v464 = vmul.f32 %v415, %v315
        %v465 = vmul.f32 %v416, %v316
        %v466 = vmul.f32 %v417, %v317
        %v467 = vmul.f32 %v418, %v318
        %v468 = vmul.f32 %v419, %v319
        %v469 = vmul.f32 %v420, %v320
        %v470 = vmul.f32 %v421, %v321
        %v471 = vmul.f32 %v422, %v322
        %v472 = vmul.f32 %v423, %v323
        %v473 = vmul.f32 %v424, %v324
        %v474 = vmul.f32 %v425, %v325
        %v475 = vmul.f32 %v426, %v326
        %v476 = vmul.f32 %v427, %v327
        %v477 = vmul.f32 %v428, %v328
        %v478 = vmul.f32 %v429, %v329
        %v479 = vmul.f32 %v430, %v330
        %v480 = vmul.f32 %v431, %v331
        %v481 = vstv %s180
        %v482 = vadd.f32 %v432, %v481
        %v483 = vadd.f32 %v433, %v481
        %v484 = vadd.f32 %v434, %v481
        %v485 = vadd.f32 %v435, %v481
        %v486 = vadd.f32 %v436, %v481
        %v487 = vadd.f32 %v437, %v481
        %v488 = vadd.f32 %v438, %v481
        %v489 = vadd.f32 %v439, %v481
        %v490 = vadd.f32 %v440, %v481
        %v491 = vadd.f32 %v441, %v481
        %v492 = vadd.f32 %v442, %v481
        %v493 = vadd.f32 %v443, %v481
        %v494 = vadd.f32 %v444, %v481
        %v495 = vadd.f32 %v445, %v481
        %v496 = vadd.f32 %v446, %v481
        %v497 = vadd.f32 %v447, %v481
        %v498 = vadd.f32 %v448, %v481
        %v499 = vadd.f32 %v449, %v481
        %v500 = vadd.f32 %v450, %v481
        %v501 = vadd.f32 %v451, %v481
        %v502 = vadd.f32 %v452, %v481
        %v503 = vadd.f32 %v453, %v481
        %v504 = vadd.f32 %v454, %v481
        %v505 = vadd.f32 %v455, %v481
        %v506 = vadd.f32 %v456, %v481
        %v507 = vadd.f32 %v457, %v481
        %v508 = vadd.f32 %v458, %v481
        %v509 = vadd.f32 %v459, %v481
        %v510 = vadd.f32 %v460, %v481
        %v511 = vadd.f32 %v461, %v481
        %v512 = vadd.f32 %v462, %v481
        %v513 = vadd.f32 %v463, %v481
        %v514 = vadd.f32 %v464, %v481
        %v515 = vadd.f32 %v465, %v481
        %v516 = vadd.f32 %v466, %v481
        %v517 = vadd.f32 %v467, %v481
        %v518 = vadd.f32 %v468, %v481
        %v519 = vadd.f32 %v469, %v481
        %v520 = vadd.f32 %v470, %v481
        %v521 = vadd.f32 %v471, %v481
        %v522 = vadd.f32 %v472, %v481
        %v523 = vadd.f32 %v473, %v481
        %v524 = vadd.f32 %v474, %v481
        %v525 = vadd.f32 %v475, %v481
        %v526 = vadd.f32 %v476, %v481
        %v527 = vadd.f32 %v477, %v481
        %v528 = vadd.f32 %v478, %v481
        %v529 = vadd.f32 %v479, %v481
        %v530 = vadd.f32 %v480, %v481
        %v531 = vmul.f32 %v482, %v283
        %v532 = vmul.f32 %v483, %v284
        %v533 = vmul.f32 %v484, %v285
        %v534 = vmul.f32 %v485, %v286
        %v535 = vmul.f32 %v486, %v287
        %v536 = vmul.f32 %v487, %v288
        %v537 = vmul.f32 %v488, %v289
        %v538 = vmul.f32 %v489, %v290
        %v539 = vmul.f32 %v490, %v291
        %v540 = vmul.f32 %v491, %v292
        %v541 = vmul.f32 %v492, %v293
        %v542 = vmul.f32 %v493, %v294
        %v543 = vmul.f32 %v494, %v295
        %v544 = vmul.f32 %v495, %v296
        %v545 = vmul.f32 %v496, %v297
        %v546 = vmul.f32 %v497, %v298
        %v547 = vmul.f32 %v498, %v299
        %v548 = vmul.f32 %v499, %v300
        %v549 = vmul.f32 %v500, %v301
        %v550 = vmul.f32 %v501, %v302
        %v551 = vmul.f32 %v502, %v303
        %v552 = vmul.f32 %v503, %v304
        %v553 = vmul.f32 %v504, %v305
        %v554 = vmul.f32 %v505, %v306
        %v555 = vmul.f32 %v506, %v307
        %v556 = vmul.f32 %v507, %v308
        %v557 = vmul.f32 %v508, %v309
        %v558 = vmul.f32 %v509, %v310
        %v559 = vmul.f32 %v510, %v311
        %v560 = vmul.f32 %v511, %v312
        %v561 = vmul.f32 %v512, %v313
        %v562 = vmul.f32 %v513, %v314
        %v563 = vmul.f32 %v514, %v315
        %v564 = vmul.f32 %v515, %v316
        %v565 = vmul.f32 %v516, %v317
        %v566 = vmul.f32 %v517, %v318
        %v567 = vmul.f32 %v518, %v319
        %v568 = vmul.f32 %v519, %v320
        %v569 = vmul.f32 %v520, %v321
        %v570 = vmul.f32 %v521, %v322
        %v571 = vmul.f32 %v522, %v323
        %v572 = vmul.f32 %v523, %v324
        %v573 = vmul.f32 %v524, %v325
        %v574 = vmul.f32 %v525, %v326
        %v575 = vmul.f32 %v526, %v327
        %v576 = vmul.f32 %v527, %v328
        %v577 = vmul.f32 %v528, %v329
        %v578 = vmul.f32 %v529, %v330
        %v579 = vmul.f32 %v530, %v331
        %v580 = vstv %s179
        %v581 = vadd.f32 %v531, %v580
        %v582 = vadd.f32 %v532, %v580
        %v583 = vadd.f32 %v533, %v580
        %v584 = vadd.f32 %v534, %v580
        %v585 = vadd.f32 %v535, %v580
        %v586 = vadd.f32 %v536, %v580
        %v587 = vadd.f32 %v537, %v580
        %v588 = vadd.f32 %v538, %v580
        %v589 = vadd.f32 %v539, %v580
        %v590 = vadd.f32 %v540, %v580
        %v591 = vadd.f32 %v541, %v580
        %v592 = vadd.f32 %v542, %v580
        %v593 = vadd.f32 %v543, %v580
        %v594 = vadd.f32 %v544, %v580
        %v595 = vadd.f32 %v545, %v580
        %v596 = vadd.f32 %v546, %v580
        %v597 = vadd.f32 %v547, %v580
        %v598 = vadd.f32 %v548, %v580
        %v599 = vadd.f32 %v549, %v580
        %v600 = vadd.f32 %v550, %v580
        %v601 = vadd.f32 %v551, %v580
        %v602 = vadd.f32 %v552, %v580
        %v603 = vadd.f32 %v553, %v580
        %v604 = vadd.f32 %v554, %v580
        %v605 = vadd.f32 %v555, %v580
        %v606 = vadd.f32 %v556, %v580
        %v607 = vadd.f32 %v557, %v580
        %v608 = vadd.f32 %v558, %v580
        %v609 = vadd.f32 %v559, %v580
        %v610 = vadd.f32 %v560, %v580
        %v611 = vadd.f32 %v561, %v580
        %v612 = vadd.f32 %v562, %v580
        %v613 = vadd.f32 %v563, %v580
        %v614 = vadd.f32 %v564, %v580
        %v615 = vadd.f32 %v565, %v580
        %v616 = vadd.f32 %v566, %v580
        %v617 = vadd.f32 %v567, %v580
        %v618 = vadd.f32 %v568, %v580
        %v619 = vadd.f32 %v569, %v580
        %v620 = vadd.f32 %v570, %v580
        %v621 = vadd.f32 %v571, %v580
        %v622 = vadd.f32 %v572, %v580
        %v623 = vadd.f32 %v573, %v580
        %v624 = vadd.f32 %v574, %v580
        %v625 = vadd.f32 %v575, %v580
        %v626 = vadd.f32 %v576, %v580
        %v627 = vadd.f32 %v577, %v580
        %v628 = vadd.f32 %v578, %v580
        %v629 = vadd.f32 %v579, %v580
        %v630 = vmul.f32 %v581, %v283
        %v631 = vmul.f32 %v582, %v284
        %v632 = vmul.f32 %v583, %v285
        %v633 = vmul.f32 %v584, %v286
        %v634 = vmul.f32 %v585, %v287
        %v635 = vmul.f32 %v586, %v288
        %v636 = vmul.f32 %v587, %v289
        %v637 = vmul.f32 %v588, %v290
        %v638 = vmul.f32 %v589, %v291
        %v639 = vmul.f32 %v590, %v292
        %v640 = vmul.f32 %v591, %v293
        %v641 = vmul.f32 %v592, %v294
        %v642 = vmul.f32 %v593, %v295
        %v643 = vmul.f32 %v594, %v296
        %v644 = vmul.f32 %v595, %v297
        %v645 = vmul.f32 %v596, %v298
        %v646 = vmul.f32 %v597, %v299
        %v647 = vmul.f32 %v598, %v300
        %v648 = vmul.f32 %v599, %v301
        %v649 = vmul.f32 %v600, %v302
        %v650 = vmul.f32 %v601, %v303
        %v651 = vmul.f32 %v602, %v304
        %v652 = vmul.f32 %v603, %v305
        %v653 = vmul.f32 %v604, %v306
        %v654 = vmul.f32 %v605, %v307
        %v655 = vmul.f32 %v606, %v308
        %v656 = vmul.f32 %v607, %v309
        %v657 = vmul.f32 %v608, %v310
        %v658 = vmul.f32 %v609, %v311
        %v659 = vmul.f32 %v610, %v312
        %v660 = vmul.f32 %v611, %v313
        %v661 = vmul.f32 %v612, %v314
        %v662 = vmul.f32 %v613, %v315
        %v663 = vmul.f32 %v614, %v316
        %v664 = vmul.f32 %v615, %v317
        %v665 = vmul.f32 %v616, %v318
        %v666 = vmul.f32 %v617, %v319
        %v667 = vmul.f32 %v618, %v320
        %v668 = vmul.f32 %v619, %v321
        %v669 = vmul.f32 %v620, %v322
        %v670 = vmul.f32 %v621, %v323
        %v671 = vmul.f32 %v622, %v324
        %v672 = vmul.f32 %v623, %v325
        %v673 = vmul.f32 %v624, %v326
        %v674 = vmul.f32 %v625, %v327
        %v675 = vmul.f32 %v626, %v328
        %v676 = vmul.f32 %v627, %v329
        %v677 = vmul.f32 %v628, %v330
        %v678 = vmul.f32 %v629, %v331
        %v679 = vstv %s178
        %v680 = vadd.f32 %v630, %v679
        %v681 = vadd.f32 %v631, %v679
        %v682 = vadd.f32 %v632, %v679
        %v683 = vadd.f32 %v633, %v679
        %v684 = vadd.f32 %v634, %v679
        %v685 = vadd.f32 %v635, %v679
        %v686 = vadd.f32 %v636, %v679
        %v687 = vadd.f32 %v637, %v679
        %v688 = vadd.f32 %v638, %v679
        %v689 = vadd.f32 %v639, %v679
        %v690 = vadd.f32 %v640, %v679
        %v691 = vadd.f32 %v641, %v679
        %v692 = vadd.f32 %v642, %v679
        %v693 = vadd.f32 %v643, %v679
        %v694 = vadd.f32 %v644, %v679
        %v695 = vadd.f32 %v645, %v679
        %v696 = vadd.f32 %v646, %v679
        %v697 = vadd.f32 %v647, %v679
        %v698 = vadd.f32 %v648, %v679
        %v699 = vadd.f32 %v649, %v679
        %v700 = vadd.f32 %v650, %v679
        %v701 = vadd.f32 %v651, %v679
        %v702 = vadd.f32 %v652, %v679
        %v703 = vadd.f32 %v653, %v679
        %v704 = vadd.f32 %v654, %v679
        %v705 = vadd.f32 %v655, %v679
        %v706 = vadd.f32 %v656, %v679
        %v707 = vadd.f32 %v657, %v679
        %v708 = vadd.f32 %v658, %v679
        %v709 = vadd.f32 %v659, %v679
        %v710 = vadd.f32 %v660, %v679
        %v711 = vadd.f32 %v661, %v679
        %v712 = vadd.f32 %v662, %v679
        %v713 = vadd.f32 %v663, %v679
        %v714 = vadd.f32 %v664, %v679
        %v715 = vadd.f32 %v665, %v679
        %v716 = vadd.f32 %v666, %v679
        %v717 = vadd.f32 %v667, %v679
        %v718 = vadd.f32 %v668, %v679
        %v719 = vadd.f32 %v669, %v679
        %v720 = vadd.f32 %v670, %v679
        %v721 = vadd.f32 %v671, %v679
        %v722 = vadd.f32 %v672, %v679
        %v723 = vadd.f32 %v673, %v679
        %v724 = vadd.f32 %v674, %v679
        %v725 = vadd.f32 %v675, %v679
        %v726 = vadd.f32 %v676, %v679
        %v727 = vadd.f32 %v677, %v679
        %v728 = vadd.f32 %v678, %v679
        %v729 = vmul.f32 %v680, %v283
        %v730 = vmul.f32 %v681, %v284
        %v731 = vmul.f32 %v682, %v285
        %v732 = vmul.f32 %v683, %v286
        %v733 = vmul.f32 %v684, %v287
        %v734 = vmul.f32 %v685, %v288
        %v735 = vmul.f32 %v686, %v289
        %v736 = vmul.f32 %v687, %v290
        %v737 = vmul.f32 %v688, %v291
        %v738 = vmul.f32 %v689, %v292
        %v739 = vmul.f32 %v690, %v293
        %v740 = vmul.f32 %v691, %v294
        %v741 = vmul.f32 %v692, %v295
        %v742 = vmul.f32 %v693, %v296
        %v743 = vmul.f32 %v694, %v297
        %v744 = vmul.f32 %v695, %v298
        %v745 = vmul.f32 %v696, %v299
        %v746 = vmul.f32 %v697, %v300
        %v747 = vmul.f32 %v698, %v301
        %v748 = vmul.f32 %v699, %v302
        %v749 = vmul.f32 %v700, %v303
        %v750 = vmul.f32 %v701, %v304
        %v751 = vmul.f32 %v702, %v305
        %v752 = vmul.f32 %v703, %v306
        %v753 = vmul.f32 %v704, %v307
        %v754 = vmul.f32 %v705, %v308
        %v755 = vmul.f32 %v706, %v309
        %v756 = vmul.f32 %v707, %v310
        %v757 = vmul.f32 %v708, %v311
        %v758 = vmul.f32 %v709, %v312
        %v759 = vmul.f32 %v710, %v313
        %v760 = vmul.f32 %v711, %v314
        %v761 = vmul.f32 %v712, %v315
        %v762 = vmul.f32 %v713, %v316
        %v763 = vmul.f32 %v714, %v317
        %v764 = vmul.f32 %v715, %v318
        %v765 = vmul.f32 %v716, %v319
        %v766 = vmul.f32 %v717, %v320
        %v767 = vmul.f32 %v718, %v321
        %v768 = vmul.f32 %v719, %v322
        %v769 = vmul.f32 %v720, %v323
        %v770 = vmul.f32 %v721, %v324
        %v771 = vmul.f32 %v722, %v325
        %v772 = vmul.f32 %v723, %v326
        %v773 = vmul.f32 %v724, %v327
        %v774 = vmul.f32 %v725, %v328
        %v775 = vmul.f32 %v726, %v329
        %v776 = vmul.f32 %v727, %v330
        %v777 = vmul.f32 %v728, %v331
        %v778 = vstv %s177
        %v779 = vadd.f32 %v729, %v778
        %v780 = vadd.f32 %v730, %v778
        %v781 = vadd.f32 %v731, %v778
        %v782 = vadd.f32 %v732, %v778
        %v783 = vadd.f32 %v733, %v778
        %v784 = vadd.f32 %v734, %v778
        %v785 = vadd.f32 %v735, %v778
        %v786 = vadd.f32 %v736, %v778
        %v787 = vadd.f32 %v737, %v778
        %v788 = vadd.f32 %v738, %v778
        %v789 = vadd.f32 %v739, %v778
        %v790 = vadd.f32 %v740, %v778
        %v791 = vadd.f32 %v741, %v778
        %v792 = vadd.f32 %v742, %v778
        %v793 = vadd.f32 %v743, %v778
        %v794 = vadd.f32 %v744, %v778
        %v795 = vadd.f32 %v745, %v778
        %v796 = vadd.f32 %v746, %v778
        %v797 = vadd.f32 %v747, %v778
        %v798 = vadd.f32 %v748, %v778
        %v799 = vadd.f32 %v749, %v778
        %v800 = vadd.f32 %v750, %v778
        %v801 = vadd.f32 %v751, %v778
        %v802 = vadd.f32 %v752, %v778
        %v803 = vadd.f32 %v753, %v778
        %v804 = vadd.f32 %v754, %v778
        %v805 = vadd.f32 %v755, %v778
        %v806 = vadd.f32 %v756, %v778
        %v807 = vadd.f32 %v757, %v778
        %v808 = vadd.f32 %v758, %v778
        %v809 = vadd.f32 %v759, %v778
        %v810 = vadd.f32 %v760, %v778
        %v811 = vadd.f32 %v761, %v778
        %v812 = vadd.f32 %v762, %v778
        %v813 = vadd.f32 %v763, %v778
        %v814 = vadd.f32 %v764, %v778
        %v815 = vadd.f32 %v765, %v778
        %v816 = vadd.f32 %v766, %v778
        %v817 = vadd.f32 %v767, %v778
        %v818 = vadd.f32 %v768, %v778
        %v819 = vadd.f32 %v769, %v778
        %v820 = vadd.f32 %v770, %v778
        %v821 = vadd.f32 %v771, %v778
        %v822 = vadd.f32 %v772, %v778
        %v823 = vadd.f32 %v773, %v778
        %v824 = vadd.f32 %v774, %v778
        %v825 = vadd.f32 %v775, %v778
        %v826 = vadd.f32 %v776, %v778
        %v827 = vadd.f32 %v777, %v778
        %v828 = vmul.f32 %v779, %v283
        %v829 = vmul.f32 %v780, %v284
        %v830 = vmul.f32 %v781, %v285
        %v831 = vmul.f32 %v782, %v286
        %v832 = vmul.f32 %v783, %v287
        %v833 = vmul.f32 %v784, %v288
        %v834 = vmul.f32 %v785, %v289
        %v835 = vmul.f32 %v786, %v290
        %v836 = vmul.f32 %v787, %v291
        %v837 = vmul.f32 %v788, %v292
        %v838 = vmul.f32 %v789, %v293
        %v839 = vmul.f32 %v790, %v294
        %v840 = vmul.f32 %v791, %v295
        %v841 = vmul.f32 %v792, %v296
        %v842 = vmul.f32 %v793, %v297
        %v843 = vmul.f32 %v794, %v298
        %v844 = vmul.f32 %v795, %v299
        %v845 = vmul.f32 %v796, %v300
        %v846 = vmul.f32 %v797, %v301
        %v847 = vmul.f32 %v798, %v302
        %v848 = vmul.f32 %v799, %v303
        %v849 = vmul.f32 %v800, %v304
        %v850 = vmul.f32 %v801, %v305
        %v851 = vmul.f32 %v802, %v306
        %v852 = vmul.f32 %v803, %v307
        %v853 = vmul.f32 %v804, %v308
        %v854 = vmul.f32 %v805, %v309
        %v855 = vmul.f32 %v806, %v310
        %v856 = vmul.f32 %v807, %v311
        %v857 = vmul.f32 %v808, %v312
        %v858 = vmul.f32 %v809, %v313
        %v859 = vmul.f32 %v810, %v314
        %v860 = vmul.f32 %v811, %v315
        %v861 = vmul.f32 %v812, %v316
        %v862 = vmul.f32 %v813, %v317
        %v863 = vmul.f32 %v814, %v318
        %v864 = vmul.f32 %v815, %v319
        %v865 = vmul.f32 %v816, %v320
        %v866 = vmul.f32 %v817, %v321
        %v867 = vmul.f32 %v818, %v322
        %v868 = vmul.f32 %v819, %v323
        %v869 = vmul.f32 %v820, %v324
        %v870 = vmul.f32 %v821, %v325
        %v871 = vmul.f32 %v822, %v326
        %v872 = vmul.f32 %v823, %v327
        %v873 = vmul.f32 %v824, %v328
        %v874 = vmul.f32 %v825, %v329
        %v875 = vmul.f32 %v826, %v330
        %v876 = vmul.f32 %v827, %v331
        %v877 = vstv %s176
        %v878 = vadd.f32 %v828, %v877
        %v879 = vadd.f32 %v829, %v877
        %v880 = vadd.f32 %v830, %v877
        %v881 = vadd.f32 %v831, %v877
        %v882 = vadd.f32 %v832, %v877
        %v883 = vadd.f32 %v833, %v877
        %v884 = vadd.f32 %v834, %v877
        %v885 = vadd.f32 %v835, %v877
        %v886 = vadd.f32 %v836, %v877
        %v887 = vadd.f32 %v837, %v877
        %v888 = vadd.f32 %v838, %v877
        %v889 = vadd.f32 %v839, %v877
        %v890 = vadd.f32 %v840, %v877
        %v891 = vadd.f32 %v841, %v877
        %v892 = vadd.f32 %v842, %v877
        %v893 = vadd.f32 %v843, %v877
        %v894 = vadd.f32 %v844, %v877
        %v895 = vadd.f32 %v845, %v877
        %v896 = vadd.f32 %v846, %v877
        %v897 = vadd.f32 %v847, %v877
        %v898 = vadd.f32 %v848, %v877
        %v899 = vadd.f32 %v849, %v877
        %v900 = vadd.f32 %v850, %v877
        %v901 = vadd.f32 %v851, %v877
        %v902 = vadd.f32 %v852, %v877
        %v903 = vadd.f32 %v853, %v877
        %v904 = vadd.f32 %v854, %v877
        %v905 = vadd.f32 %v855, %v877
        %v906 = vadd.f32 %v856, %v877
        %v907 = vadd.f32 %v857, %v877
        %v908 = vadd.f32 %v858, %v877
        %v909 = vadd.f32 %v859, %v877
        %v910 = vadd.f32 %v860, %v877
        %v911 = vadd.f32 %v861, %v877
        %v912 = vadd.f32 %v862, %v877
        %v913 = vadd.f32 %v863, %v877
        %v914 = vadd.f32 %v864, %v877
        %v915 = vadd.f32 %v865, %v877
        %v916 = vadd.f32 %v866, %v877
        %v917 = vadd.f32 %v867, %v877
        %v918 = vadd.f32 %v868, %v877
        %v919 = vadd.f32 %v869, %v877
        %v920 = vadd.f32 %v870, %v877
        %v921 = vadd.f32 %v871, %v877
        %v922 = vadd.f32 %v872, %v877
        %v923 = vadd.f32 %v873, %v877
        %v924 = vadd.f32 %v874, %v877
        %v925 = vadd.f32 %v875, %v877
        %v926 = vadd.f32 %v876, %v877
        %v927 = vand.u32 2147483647, %v878
        %v928 = vand.u32 2147483647, %v879
        %v929 = vand.u32 2147483647, %v880
        %v930 = vand.u32 2147483647, %v881
        %v931 = vand.u32 2147483647, %v882
        %v932 = vand.u32 2147483647, %v883
        %v933 = vand.u32 2147483647, %v884
        %v934 = vand.u32 2147483647, %v885
        %v935 = vand.u32 2147483647, %v886
        %v936 = vand.u32 2147483647, %v887
        %v937 = vand.u32 2147483647, %v888
        %v938 = vand.u32 2147483647, %v889
        %v939 = vand.u32 2147483647, %v890
        %v940 = vand.u32 2147483647, %v891
        %v941 = vand.u32 2147483647, %v892
        %v942 = vand.u32 2147483647, %v893
        %v943 = vand.u32 2147483647, %v894
        %v944 = vand.u32 2147483647, %v895
        %v945 = vand.u32 2147483647, %v896
        %v946 = vand.u32 2147483647, %v897
        %v947 = vand.u32 2147483647, %v898
        %v948 = vand.u32 2147483647, %v899
        %v949 = vand.u32 2147483647, %v900
        %v950 = vand.u32 2147483647, %v901
        %v951 = vand.u32 2147483647, %v902
        %v952 = vand.u32 2147483647, %v903
        %v953 = vand.u32 2147483647, %v904
        %v954 = vand.u32 2147483647, %v905
        %v955 = vand.u32 2147483647, %v906
        %v956 = vand.u32 2147483647, %v907
        %v957 = vand.u32 2147483647, %v908
        %v958 = vand.u32 2147483647, %v909
        %v959 = vand.u32 2147483647, %v910
        %v960 = vand.u32 2147483647, %v911
        %v961 = vand.u32 2147483647, %v912
        %v962 = vand.u32 2147483647, %v913
        %v963 = vand.u32 2147483647, %v914
        %v964 = vand.u32 2147483647, %v915
        %v965 = vand.u32 2147483647, %v916
        %v966 = vand.u32 2147483647, %v917
        %v967 = vand.u32 2147483647, %v918
        %v968 = vand.u32 2147483647, %v919
        %v969 = vand.u32 2147483647, %v920
        %v970 = vand.u32 2147483647, %v921
        %v971 = vand.u32 2147483647, %v922
        %v972 = vand.u32 2147483647, %v923
        %v973 = vand.u32 2147483647, %v924
        %v974 = vand.u32 2147483647, %v925
        %v975 = vand.u32 2147483647, %v926
        %v976 = vmin.f32 %v927, 10.0
        %v977 = vmin.f32 %v928, 10.0
        %v978 = vmin.f32 %v929, 10.0
        %v979 = vmin.f32 %v930, 10.0
        %v980 = vmin.f32 %v931, 10.0
        %v981 = vmin.f32 %v932, 10.0
        %v982 = vmin.f32 %v933, 10.0
        %v983 = vmin.f32 %v934, 10.0
        %v984 = vmin.f32 %v935, 10.0
        %v985 = vmin.f32 %v936, 10.0
        %v986 = vmin.f32 %v937, 10.0
        %v987 = vmin.f32 %v938, 10.0
        %v988 = vmin.f32 %v939, 10.0
        %v989 = vmin.f32 %v940, 10.0
        %v990 = vmin.f32 %v941, 10.0
        %v991 = vmin.f32 %v942, 10.0
        %v992 = vmin.f32 %v943, 10.0
        %v993 = vmin.f32 %v944, 10.0
        %v994 = vmin.f32 %v945, 10.0
        %v995 = vmin.f32 %v946, 10.0
        %v996 = vmin.f32 %v947, 10.0
        %v997 = vmin.f32 %v948, 10.0
        %v998 = vmin.f32 %v949, 10.0
        %v999 = vmin.f32 %v950, 10.0
        %v1000 = vmin.f32 %v951, 10.0
        %v1001 = vmin.f32 %v952, 10.0
        %v1002 = vmin.f32 %v953, 10.0
        %v1003 = vmin.f32 %v954, 10.0
        %v1004 = vmin.f32 %v955, 10.0
        %v1005 = vmin.f32 %v956, 10.0
        %v1006 = vmin.f32 %v957, 10.0
        %v1007 = vmin.f32 %v958, 10.0
        %v1008 = vmin.f32 %v959, 10.0
        %v1009 = vmin.f32 %v960, 10.0
        %v1010 = vmin.f32 %v961, 10.0
        %v1011 = vmin.f32 %v962, 10.0
        %v1012 = vmin.f32 %v963, 10.0
        %v1013 = vmin.f32 %v964, 10.0
        %v1014 = vmin.f32 %v965, 10.0
        %v1015 = vmin.f32 %v966, 10.0
        %v1016 = vmin.f32 %v967, 10.0
        %v1017 = vmin.f32 %v968, 10.0
        %v1018 = vmin.f32 %v969, 10.0
        %v1019 = vmin.f32 %v970, 10.0
        %v1020 = vmin.f32 %v971, 10.0
        %v1021 = vmin.f32 %v972, 10.0
        %v1022 = vmin.f32 %v973, 10.0
        %v1023 = vmin.f32 %v974, 10.0
        %v1024 = vmin.f32 %v975, 10.0
        %v1025 = vsub.f32 0.0, %v976
        %v1026 = vsub.f32 0.0, %v977
        %v1027 = vsub.f32 0.0, %v978
        %v1028 = vsub.f32 0.0, %v979
        %v1029 = vsub.f32 0.0, %v980
        %v1030 = vsub.f32 0.0, %v981
        %v1031 = vsub.f32 0.0, %v982
        %v1032 = vsub.f32 0.0, %v983
        %v1033 = vsub.f32 0.0, %v984
        %v1034 = vsub.f32 0.0, %v985
        %v1035 = vsub.f32 0.0, %v986
        %v1036 = vsub.f32 0.0, %v987
        %v1037 = vsub.f32 0.0, %v988
        %v1038 = vsub.f32 0.0, %v989
        %v1039 = vsub.f32 0.0, %v990
        %v1040 = vsub.f32 0.0, %v991
        %v1041 = vsub.f32 0.0, %v992
        %v1042 = vsub.f32 0.0, %v993
        %v1043 = vsub.f32 0.0, %v994
        %v1044 = vsub.f32 0.0, %v995
        %v1045 = vsub.f32 0.0, %v996
        %v1046 = vsub.f32 0.0, %v997
        %v1047 = vsub.f32 0.0, %v998
        %v1048 = vsub.f32 0.0, %v999
        %v1049 = vsub.f32 0.0, %v1000
        %v1050 = vsub.f32 0.0, %v1001
        %v1051 = vsub.f32 0.0, %v1002
        %v1052 = vsub.f32 0.0, %v1003
        %v1053 = vsub.f32 0.0, %v1004
        %v1054 = vsub.f32 0.0, %v1005
        %v1055 = vsub.f32 0.0, %v1006
        %v1056 = vsub.f32 0.0, %v1007
        %v1057 = vsub.f32 0.0, %v1008
        %v1058 = vsub.f32 0.0, %v1009
        %v1059 = vsub.f32 0.0, %v1010
        %v1060 = vsub.f32 0.0, %v1011
        %v1061 = vsub.f32 0.0, %v1012
        %v1062 = vsub.f32 0.0, %v1013
        %v1063 = vsub.f32 0.0, %v1014
        %v1064 = vsub.f32 0.0, %v1015
        %v1065 = vsub.f32 0.0, %v1016
        %v1066 = vsub.f32 0.0, %v1017
        %v1067 = vsub.f32 0.0, %v1018
        %v1068 = vsub.f32 0.0, %v1019
        %v1069 = vsub.f32 0.0, %v1020
        %v1070 = vsub.f32 0.0, %v1021
        %v1071 = vsub.f32 0.0, %v1022
        %v1072 = vsub.f32 0.0, %v1023
        %v1073 = vsub.f32 0.0, %v1024
        %v1074 = vmul.f32 %v1025, 1.442695
        %v1075 = vpow.pop %v1074
        %v1076 = vmul.f32 %v1026, 1.442695
        %v1077 = vpow.pop %v1076
        %v1078 = vmul.f32 %v1027, 1.442695
        %v1079 = vpow.pop %v1078
        %v1080 = vmul.f32 %v1028, 1.442695
        %v1081 = vpow.pop %v1080
        %v1082 = vmul.f32 %v1029, 1.442695
        %v1083 = vpow.pop %v1082
        %v1084 = vmul.f32 %v1030, 1.442695
        %v1085 = vpow.pop %v1084
        %v1086 = vmul.f32 %v1031, 1.442695
        %v1087 = vpow.pop %v1086
        %v1088 = vmul.f32 %v1032, 1.442695
        %v1089 = vpow.pop %v1088
        %v1090 = vmul.f32 %v1033, 1.442695
        %v1091 = vpow.pop %v1090
        %v1092 = vmul.f32 %v1034, 1.442695
        %v1093 = vpow.pop %v1092
        %v1094 = vmul.f32 %v1035, 1.442695
        %v1095 = vpow.pop %v1094
        %v1096 = vmul.f32 %v1036, 1.442695
        %v1097 = vpow.pop %v1096
        %v1098 = vmul.f32 %v1037, 1.442695
        %v1099 = vpow.pop %v1098
        %v1100 = vmul.f32 %v1038, 1.442695
        %v1101 = vpow.pop %v1100
        %v1102 = vmul.f32 %v1039, 1.442695
        %v1103 = vpow.pop %v1102
        %v1104 = vmul.f32 %v1040, 1.442695
        %v1105 = vpow.pop %v1104
        %v1106 = vmul.f32 %v1041, 1.442695
        %v1107 = vpow.pop %v1106
        %v1108 = vmul.f32 %v1042, 1.442695
        %v1109 = vpow.pop %v1108
        %v1110 = vmul.f32 %v1043, 1.442695
        %v1111 = vpow.pop %v1110
        %v1112 = vmul.f32 %v1044, 1.442695
        %v1113 = vpow.pop %v1112
        %v1114 = vmul.f32 %v1045, 1.442695
        %v1115 = vpow.pop %v1114
        %v1116 = vmul.f32 %v1046, 1.442695
        %v1117 = vpow.pop %v1116
        %v1118 = vmul.f32 %v1047, 1.442695
        %v1119 = vpow.pop %v1118
        %v1120 = vmul.f32 %v1048, 1.442695
        %v1121 = vpow.pop %v1120
        %v1122 = vmul.f32 %v1049, 1.442695
        %v1123 = vpow.pop %v1122
        %v1124 = vmul.f32 %v1050, 1.442695
        %v1125 = vpow.pop %v1124
        %v1126 = vmul.f32 %v1051, 1.442695
        %v1127 = vpow.pop %v1126
        %v1128 = vmul.f32 %v1052, 1.442695
        %v1129 = vpow.pop %v1128
        %v1130 = vmul.f32 %v1053, 1.442695
        %v1131 = vpow.pop %v1130
        %v1132 = vmul.f32 %v1054, 1.442695
        %v1133 = vpow.pop %v1132
        %v1134 = vmul.f32 %v1055, 1.442695
        %v1135 = vpow.pop %v1134
        %v1136 = vmul.f32 %v1056, 1.442695
        %v1137 = vpow.pop %v1136
        %v1138 = vmul.f32 %v1057, 1.442695
        %v1139 = vpow.pop %v1138
        %v1140 = vmul.f32 %v1058, 1.442695
        %v1141 = vpow.pop %v1140
        %v1142 = vmul.f32 %v1059, 1.442695
        %v1143 = vpow.pop %v1142
        %v1144 = vmul.f32 %v1060, 1.442695
        %v1145 = vpow.pop %v1144
        %v1146 = vmul.f32 %v1061, 1.442695
        %v1147 = vpow.pop %v1146
        %v1148 = vmul.f32 %v1062, 1.442695
        %v1149 = vpow.pop %v1148
        %v1150 = vmul.f32 %v1063, 1.442695
        %v1151 = vpow.pop %v1150
        %v1152 = vmul.f32 %v1064, 1.442695
        %v1153 = vpow.pop %v1152
        %v1154 = vmul.f32 %v1065, 1.442695
        %v1155 = vpow.pop %v1154
        %v1156 = vmul.f32 %v1066, 1.442695
        %v1157 = vpow.pop %v1156
        %v1158 = vmul.f32 %v1067, 1.442695
        %v1159 = vpow.pop %v1158
        %v1160 = vmul.f32 %v1068, 1.442695
        %v1161 = vpow.pop %v1160
        %v1162 = vmul.f32 %v1069, 1.442695
        %v1163 = vpow.pop %v1162
        %v1164 = vmul.f32 %v1070, 1.442695
        %v1165 = vpow.pop %v1164
        %v1166 = vmul.f32 %v1071, 1.442695
        %v1167 = vpow.pop %v1166
        %v1168 = vmul.f32 %v1072, 1.442695
        %v1169 = vpow.pop %v1168
        %v1170 = vmul.f32 %v1073, 1.442695
        %v1171 = vpow.pop %v1170
        %v1172 = vadd.f32 %v1075, 1e-06
        %v1173 = vadd.f32 %v1077, 1e-06
        %v1174 = vadd.f32 %v1079, 1e-06
        %v1175 = vadd.f32 %v1081, 1e-06
        %v1176 = vadd.f32 %v1083, 1e-06
        %v1177 = vadd.f32 %v1085, 1e-06
        %v1178 = vadd.f32 %v1087, 1e-06
        %v1179 = vadd.f32 %v1089, 1e-06
        %v1180 = vadd.f32 %v1091, 1e-06
        %v1181 = vadd.f32 %v1093, 1e-06
        %v1182 = vadd.f32 %v1095, 1e-06
        %v1183 = vadd.f32 %v1097, 1e-06
        %v1184 = vadd.f32 %v1099, 1e-06
        %v1185 = vadd.f32 %v1101, 1e-06
        %v1186 = vadd.f32 %v1103, 1e-06
        %v1187 = vadd.f32 %v1105, 1e-06
        %v1188 = vadd.f32 %v1107, 1e-06
        %v1189 = vadd.f32 %v1109, 1e-06
        %v1190 = vadd.f32 %v1111, 1e-06
        %v1191 = vadd.f32 %v1113, 1e-06
        %v1192 = vadd.f32 %v1115, 1e-06
        %v1193 = vadd.f32 %v1117, 1e-06
        %v1194 = vadd.f32 %v1119, 1e-06
        %v1195 = vadd.f32 %v1121, 1e-06
        %v1196 = vadd.f32 %v1123, 1e-06
        %v1197 = vadd.f32 %v1125, 1e-06
        %v1198 = vadd.f32 %v1127, 1e-06
        %v1199 = vadd.f32 %v1129, 1e-06
        %v1200 = vadd.f32 %v1131, 1e-06
        %v1201 = vadd.f32 %v1133, 1e-06
        %v1202 = vadd.f32 %v1135, 1e-06
        %v1203 = vadd.f32 %v1137, 1e-06
        %v1204 = vadd.f32 %v1139, 1e-06
        %v1205 = vadd.f32 %v1141, 1e-06
        %v1206 = vadd.f32 %v1143, 1e-06
        %v1207 = vadd.f32 %v1145, 1e-06
        %v1208 = vadd.f32 %v1147, 1e-06
        %v1209 = vadd.f32 %v1149, 1e-06
        %v1210 = vadd.f32 %v1151, 1e-06
        %v1211 = vadd.f32 %v1153, 1e-06
        %v1212 = vadd.f32 %v1155, 1e-06
        %v1213 = vadd.f32 %v1157, 1e-06
        %v1214 = vadd.f32 %v1159, 1e-06
        %v1215 = vadd.f32 %v1161, 1e-06
        %v1216 = vadd.f32 %v1163, 1e-06
        %v1217 = vadd.f32 %v1165, 1e-06
        %v1218 = vadd.f32 %v1167, 1e-06
        %v1219 = vadd.f32 %v1169, 1e-06
        %v1220 = vadd.f32 %v1171, 1e-06
        %1221 = vst [vmem:[%s173] sm:$0xff] %v1172
        %1222 = vst [vmem:[%s173 + $0x8] sm:$0xff] %v1173
        %1223 = vst [vmem:[%s173 + $0x10] sm:$0xff] %v1174
        %1224 = vst [vmem:[%s173 + $0x18] sm:$0xff] %v1175
        %1225 = vst [vmem:[%s173 + $0x20] sm:$0xff] %v1176
        %1226 = vst [vmem:[%s173 + $0x28] sm:$0xff] %v1177
        %1227 = vst [vmem:[%s173 + $0x30] sm:$0xff] %v1178
        %1228 = vst [vmem:[%s173 + $0x38] sm:$0xff] %v1179
        %1229 = vst [vmem:[%s173 + $0x40] sm:$0xff] %v1180
        %1230 = vst [vmem:[%s173 + $0x48] sm:$0xff] %v1181
        %1231 = vst [vmem:[%s173 + $0x50] sm:$0xff] %v1182
        %1232 = vst [vmem:[%s173 + $0x58] sm:$0xff] %v1183
        %1233 = vst [vmem:[%s173 + $0x60] sm:$0xff] %v1184
        %1234 = vst [vmem:[%s173 + $0x68] sm:$0xff] %v1185
        %1235 = vst [vmem:[%s173 + $0x70] sm:$0xff] %v1186
        %1236 = vst [vmem:[%s173 + $0x78] sm:$0xff] %v1187
        %1237 = vst [vmem:[%s173 + $0x80] sm:$0xff] %v1188
        %1238 = vst [vmem:[%s173 + $0x88] sm:$0xff] %v1189
        %1239 = vst [vmem:[%s173 + $0x90] sm:$0xff] %v1190
        %1240 = vst [vmem:[%s173 + $0x98] sm:$0xff] %v1191
        %1241 = vst [vmem:[%s173 + $0xa0] sm:$0xff] %v1192
        %1242 = vst [vmem:[%s173 + $0xa8] sm:$0xff] %v1193
        %1243 = vst [vmem:[%s173 + $0xb0] sm:$0xff] %v1194
        %1244 = vst [vmem:[%s173 + $0xb8] sm:$0xff] %v1195
        %1245 = vst [vmem:[%s173 + $0xc0] sm:$0xff] %v1196
        %1246 = vst [vmem:[%s173 + $0xc8] sm:$0xff] %v1197
        %1247 = vst [vmem:[%s173 + $0xd0] sm:$0xff] %v1198
        %1248 = vst [vmem:[%s173 + $0xd8] sm:$0xff] %v1199
        %1249 = vst [vmem:[%s173 + $0xe0] sm:$0xff] %v1200
        %1250 = vst [vmem:[%s173 + $0xe8] sm:$0xff] %v1201
        %1251 = vst [vmem:[%s173 + $0xf0] sm:$0xff] %v1202
        %1252 = vst [vmem:[%s173 + $0xf8] sm:$0xff] %v1203
        %1253 = vst [vmem:[%s173 + $0x100] sm:$0xff] %v1204
        %1254 = vst [vmem:[%s173 + $0x108] sm:$0xff] %v1205
        %1255 = vst [vmem:[%s173 + $0x110] sm:$0xff] %v1206
        %1256 = vst [vmem:[%s173 + $0x118] sm:$0xff] %v1207
        %1257 = vst [vmem:[%s173 + $0x120] sm:$0xff] %v1208
        %1258 = vst [vmem:[%s173 + $0x128] sm:$0xff] %v1209
        %1259 = vst [vmem:[%s173 + $0x130] sm:$0xff] %v1210
        %1260 = vst [vmem:[%s173 + $0x138] sm:$0xff] %v1211
        %1261 = vst [vmem:[%s173 + $0x140] sm:$0xff] %v1212
        %1262 = vst [vmem:[%s173 + $0x148] sm:$0xff] %v1213
        %1263 = vst [vmem:[%s173 + $0x150] sm:$0xff] %v1214
        %1264 = vst [vmem:[%s173 + $0x158] sm:$0xff] %v1215
        %1265 = vst [vmem:[%s173 + $0x160] sm:$0xff] %v1216
        %1266 = vst [vmem:[%s173 + $0x168] sm:$0xff] %v1217
        %1267 = vst [vmem:[%s173 + $0x170] sm:$0xff] %v1218
        %1268 = vst [vmem:[%s173 + $0x178] sm:$0xff] %v1219
        %1269 = vst [vmem:[%s173 + $0x180] sm:$0xff] %v1220
        %s1270 = sand.u32 %s75, 1
        %s1271 = scalar_lea.sflag [#allocation4], %s1270
        %s1272 = sand.u32 %s75, 1
        %s1273 = smul.addr %s1272, 392
        %s1274 = scalar_lea.vmem [#allocation7], %s1273
        // Predicated region
        $region37: #{tpu_custom_call.1} parent=27 // pred_check
          %p1275 = pneg %p85
        $region38: #{tpu_custom_call.1} parent=27 // pred_check_branch
          %1277 = sbr.rel (%p1275) target = $region40
        $region39: #{tpu_custom_call.1} parent=27 // pred_region
          %s1278 = smul.u32 49, %s20
          %s1280 = ssub.s32 6272, 6272
          %1281 = vsyncadd %s1271, %s1280
          %s1282 = smul.addr %s1278, 128
          %s1283 = scalar_lea.hbm %s2, %s1282
          %s1284 = sshll.u32 %s1274, 4
          %s1285 = int_to_ptr.vmem [resolvable:$true] %s1284
          %1290 = dma.vmem_to_hbm [thread:$0]  %s1285, 6272, %s1283, %s1271, 128, 128, 8
        $region40: #{tpu_custom_call.1} parent=27 // pred_fallthru
          _
      $region28: #{tpu_custom_call.1} parent=5 // pred_fallthru
        _
      %p1291 = scmp.le.s32.totalorder 2, %s15
      // Predicated region
      $region41: #{tpu_custom_call.1} parent=5 // pred_check
        %p1292 = pneg %p1291
      $region42: #{tpu_custom_call.1} parent=5 // pred_check_branch
        %1294 = sbr.rel (%p1292) target = $region44
      $region43: #{tpu_custom_call.1} parent=5 // pred_region
        %s1295 = ssub.s32 %s15, 2
        // Predicated region
        $region45: #{tpu_custom_call.1} parent=43 // pred_check
          %p1296 = pneg %p91
        $region46: #{tpu_custom_call.1} parent=43 // pred_check_branch
          %1298 = sbr.rel (%p1296) target = $region48
        $region47: #{tpu_custom_call.1} parent=43 // pred_region
          %s1299 = sand.u32 %s76, 1
          %s1300 = scalar_lea.sflag [#allocation4], %s1299
          %s1301 = sand.u32 %s76, 1
          %s1302 = smul.addr %s1301, 392
          %s1303 = scalar_lea.vmem [#allocation7], %s1302
          %1304 = dma.done %s1300, 6272
        $region48: #{tpu_custom_call.1} parent=43 // pred_fallthru
          _
      $region44: #{tpu_custom_call.1} parent=5 // pred_fallthru
        _
    $region6: #{tpu_custom_call.1} parent=1 // loop_footer
      %s19 = sadd.s32 1, %s15
    $region7: #{tpu_custom_call.1} parent=1 // loop_footer_branch
      %14 = sbr.rel target = $region3
    $region8: #{tpu_custom_call.1} parent=1 // loop_exit
      _
    %1305 = vsyncpa [#allocation3], 1
    %s1306 = scalar_lea.sflag [#allocation3], 1
    %1307 = vsyncpa %s1306, 1
    %1308 = vsyncpa [#allocation4], 1
    %s1309 = scalar_lea.sflag [#allocation4], 1
    %1310 = vsyncpa %s1309, 1
    %1311 = vsyncpa [#allocation5], 1
    %s1312 = scalar_lea.sflag [#allocation5], 1
    %1313 = vsyncpa %s1312, 1

</llo_original>
